<compile_context>
chip_gen: v7x
topology: tpu7x:2x2x1
jax: 0.10.0
libtpu: 0.0.40
codegen_flags: <defaults>
</compile_context>

<pallas_src>
import functools

import jax
import jax.numpy as jnp
from jax.experimental import pallas as pl
from jax.experimental.pallas import tpu as pltpu


# --------------------------------------------------------------------------
# Tiling / VMEM budgeting
# --------------------------------------------------------------------------
def _vmem_budget():
    """Returns (per-input f32 tile byte cap, scoped vmem_limit_bytes)."""
    vmem = 64 << 20  # conservative default: assume v7x-sized VMEM
    try:
        info = pltpu.get_tpu_info()
        cap = getattr(info, "vmem_capacity_bytes", None)
        if cap:
            vmem = int(cap)
    except Exception:
        pass
    vmem_limit = (vmem * 3) // 4              # 96 MiB on 128-MiB parts, 48 MiB on v7x
    bytes_cap = (8 << 20) if vmem >= (100 << 20) else (4 << 20)
    return bytes_cap, vmem_limit


def _pick_row_tile(rows, width, itemsize, bytes_cap):
    """Rows per tile.  Only bytes_cap governs the tile size (no max_rows cap).
    Footprint check: (2 inputs x 2 buffers + ~4 f32 temps) * tile <= vmem_limit."""
    mult = 8 if itemsize >= 4 else (16 if itemsize == 2 else 32)
    cap = max(mult, (bytes_cap // (4 * max(int(width), 1))) // mult * mult)
    if rows <= cap:
        return int(rows)          # single full-dim block: no alignment constraint
    return int(cap)               # sublane-aligned; ragged tail masked in-kernel


# --------------------------------------------------------------------------
# In-kernel helpers
# --------------------------------------------------------------------------
def _scatter_block(kl_part, sq_part, cos_part):
    """Place the three scalar partials into a lane-dense (8,128) output block."""
    sub = jax.lax.broadcasted_iota(jnp.int32, (8, 128), 0)
    lane = jax.lax.broadcasted_iota(jnp.int32, (8, 128), 1)
    first = lane == 0
    return jnp.where((sub == 0) & first, kl_part,
           jnp.where((sub == 1) & first, sq_part,
           jnp.where((sub == 2) & first, cos_part, jnp.float32(0.0))))


def _attn_partials(t_raw, s_raw, rows, tile_rows):
    """Per-block KL and squared-error partial sums over softmaxed rows."""
    t = t_raw.astype(jnp.float32)
    s = s_raw.astype(jnp.float32)
    t_m = jnp.max(t, axis=-1, keepdims=True)
    s_m = jnp.max(s, axis=-1, keepdims=True)
    t_e = jnp.exp(t - t_m)
    s_e = jnp.exp(s - s_m)
    t_z = jnp.sum(t_e, axis=-1, keepdims=True)
    s_z = jnp.sum(s_e, axis=-1, keepdims=True)
    t_sm = t_e / t_z
    s_sm = s_e / s_z
    # KL identity: sum t_sm*(log t_sm - log s_sm)
    #            = sum t_sm*(t - s) + sum_rows (s_m + log s_z - t_m - log t_z)
    kl_row = (jnp.sum(t_sm * (t - s), axis=-1, keepdims=True)
              + (s_m - t_m) + jnp.log(s_z) - jnp.log(t_z))
    sq_row = jnp.sum((s_sm - t_sm) ** 2, axis=-1, keepdims=True)
    # Mask ragged-tail rows (out-of-bounds garbage) -> they contribute exactly 0.
    ridx = (pl.program_id(0) * tile_rows
            + jax.lax.broadcasted_iota(jnp.int32, kl_row.shape, 0))
    valid = ridx < rows
    kl_part = jnp.sum(jnp.where(valid, kl_row, 0.0))
    sq_part = jnp.sum(jnp.where(valid, sq_row, 0.0))
    return kl_part, sq_part


def _cosine_rows(t_raw, s_raw):
    """Per-row cosine similarity with PyTorch semantics: dot / sqrt(max(w1*w2, eps^2))."""
    t = t_raw.astype(jnp.float32)
    s = s_raw.astype(jnp.float32)
    eps2 = jnp.float32(1e-16)          # eps = 1e-8, clamp applied to the product
    dot = jnp.sum(t * s, axis=-1, keepdims=True)
    w1 = jnp.sum(t * t, axis=-1, keepdims=True)
    w2 = jnp.sum(s * s, axis=-1, keepdims=True)
    return dot * jax.lax.rsqrt(jnp.maximum(w1 * w2, eps2))


# --------------------------------------------------------------------------
# Kernels
# --------------------------------------------------------------------------
def _attn_kernel(t_ref, s_ref, out_ref, *, rows, tile_rows):
    kl, sq = _attn_partials(t_ref[...], s_ref[...], rows, tile_rows)
    out_ref[0] = _scatter_block(kl, sq, jnp.float32(0.0))


def _attn_repr_kernel(t_ref, s_ref, tr_ref, sr_ref, out_ref, *, rows, tile_rows):
    """Attention partials every step; repr cosine fused on grid step 0 only
    (repr blocks have a constant index_map so they stay resident in VMEM)."""
    kl, sq = _attn_partials(t_ref[...], s_ref[...], rows, tile_rows)

    @pl.when(pl.program_id(0) != 0)
    def _():
        out_ref[0] = _scatter_block(kl, sq, jnp.float32(0.0))

    @pl.when(pl.program_id(0) == 0)
    def _():
        cos_sum = jnp.sum(_cosine_rows(tr_ref[...], sr_ref[...]))
        out_ref[0] = _scatter_block(kl, sq, cos_sum)


def _cosine_kernel(t_ref, s_ref, out_ref, *, rows, tile_rows):
    cos = _cosine_rows(t_ref[...], s_ref[...])
    ridx = (pl.program_id(0) * tile_rows
            + jax.lax.broadcasted_iota(jnp.int32, cos.shape, 0))
    part = jnp.sum(jnp.where(ridx < rows, cos, 0.0))
    out_ref[0] = _scatter_block(jnp.float32(0.0), jnp.float32(0.0), part)


# --------------------------------------------------------------------------
# pallas_call wrappers
# --------------------------------------------------------------------------
def _attention_partial_sums(t2d, s2d, t_repr=None, s_repr=None):
    """t2d/s2d: (B*S, S) attention logits.  Optional resident repr for fusion.
    Returns (kl_sum, sqerr_sum, cos_sum) -- cos_sum is 0 unless repr was fused."""
    R, S = t2d.shape
    bytes_cap, vmem_limit = _vmem_budget()
    itemsize = min(t2d.dtype.itemsize, s2d.dtype.itemsize)
    TM = _pick_row_tile(R, S, itemsize, bytes_cap)
    NB = pl.cdiv(R, TM)

    in_specs = [pl.BlockSpec((TM, S), lambda i: (i, 0)),
                pl.BlockSpec((TM, S), lambda i: (i, 0))]
    args = [t2d, s2d]
    if t_repr is not None:
        Br, G = t_repr.shape
        in_specs += [pl.BlockSpec((Br, G), lambda i: (0, 0)),
                     pl.BlockSpec((Br, G), lambda i: (0, 0))]
        args += [t_repr, s_repr]
        kernel = functools.partial(_attn_repr_kernel, rows=R, tile_rows=TM)
    else:
        kernel = functools.partial(_attn_kernel, rows=R, tile_rows=TM)

    out = pl.pallas_call(
        kernel,
        out_shape=jax.ShapeDtypeStruct((NB, 8, 128), jnp.float32),
        grid=(NB,),
        in_specs=in_specs,
        out_specs=pl.BlockSpec((1, 8, 128), lambda i: (i, 0, 0)),
        compiler_params=pltpu.CompilerParams(
            dimension_semantics=("parallel",),
            vmem_limit_bytes=vmem_limit),
    )(*args)
    return jnp.sum(out[:, 0, 0]), jnp.sum(out[:, 1, 0]), jnp.sum(out[:, 2, 0])


def _cosine_sum(t_repr, s_repr):
    """Standalone cosine-sum kernel (fallback when not fused into attention)."""
    B, G = t_repr.shape
    bytes_cap, vmem_limit = _vmem_budget()
    itemsize = min(t_repr.dtype.itemsize, s_repr.dtype.itemsize)
    TB = _pick_row_tile(B, G, itemsize, bytes_cap)
    NB = pl.cdiv(B, TB)
    out = pl.pallas_call(
        functools.partial(_cosine_kernel, rows=B, tile_rows=TB),
        out_shape=jax.ShapeDtypeStruct((NB, 8, 128), jnp.float32),
        grid=(NB,),
        in_specs=[pl.BlockSpec((TB, G), lambda i: (i, 0)),
                  pl.BlockSpec((TB, G), lambda i: (i, 0))],
        out_specs=pl.BlockSpec((1, 8, 128), lambda i: (i, 0, 0)),
        compiler_params=pltpu.CompilerParams(
            dimension_semantics=("parallel",),
            vmem_limit_bytes=vmem_limit),
    )(t_repr, s_repr)
    return jnp.sum(out[:, 2, 0])


# --------------------------------------------------------------------------
# Full loss (mirrors KnowledgeDistillationLoss.forward)
# --------------------------------------------------------------------------
def knowledge_distillation_loss(teacher_outputs, student_outputs,
                                alpha_attn=0.5, beta_attn=0.5,
                                lambda_repr=1.0, attention_weights=None):
    attention_weights = attention_weights if attention_weights is not None else {}
    t_atts = teacher_outputs["attentions"]
    s_atts = student_outputs["attentions"]
    t_repr = teacher_outputs["repr"]
    s_repr = student_outputs["repr"]

    keys = list(t_atts.keys())
    Br, G = t_repr.shape
    # Fuse the repr cosine into the first attention call if the (resident,
    # double-buffered) repr blocks fit comfortably in VMEM.
    repr_bytes = 2 * 2 * Br * G * max(t_repr.dtype.itemsize, s_repr.dtype.itemsize)
    fuse_repr = bool(keys) and repr_bytes <= (8 << 20)

    total = jnp.float32(0.0)
    cos_sum = None
    for idx, key in enumerate(keys):
        t = t_atts[key]
        s = s_atts[key]
        B, S, S2 = t.shape
        # Metadata-only reshape for contiguous arrays -> no extra HBM pass.
        t2d = jnp.reshape(t, (B * S, S2))
        s2d = jnp.reshape(s, (B * S, S2))
        if fuse_repr and idx == 0:
            kl, sq, cos_sum = _attention_partial_sums(t2d, s2d, t_repr, s_repr)
        else:
            kl, sq, _ = _attention_partial_sums(t2d, s2d)
        w = float(attention_weights.get(key, 1.0))
        # F.kl_div(..., 'batchmean') -> / B ; F.mse_loss -> / (B*S*S)
        total = total + w * (alpha_attn * sq / float(B * S * S2)
                             + beta_attn * kl / float(B))

    if cos_sum is None:
        cos_sum = _cosine_sum(t_repr, s_repr)
    cosine_loss = jnp.float32(1.0) - cos_sum / jnp.float32(Br)
    return total + lambda_repr * cosine_loss


# --------------------------------------------------------------------------
# Pure-JAX reference for sanity checking
# --------------------------------------------------------------------------
def _reference_loss(teacher_outputs, student_outputs,
                    alpha_attn, beta_attn, lambda_repr, attention_weights):
    total = 0.0
    for key in teacher_outputs["attentions"].keys():
        t = jax.nn.softmax(teacher_outputs["attentions"][key].astype(jnp.float32), -1)
        s = jax.nn.softmax(student_outputs["attentions"][key].astype(jnp.float32), -1)
        B = t.shape[0]
        kl = jnp.sum(t * (jnp.log(t) - jnp.log(s))) / B
        mse = jnp.mean((s - t) ** 2)
        w = attention_weights.get(key, 1.0)
        total = total + w * (alpha_attn * mse + beta_attn * kl)
    tr = teacher_outputs["repr"].astype(jnp.float32)
    sr = student_outputs["repr"].astype(jnp.float32)
    dot = jnp.sum(tr * sr, axis=-1)
    w1 = jnp.sum(tr * tr, axis=-1)
    w2 = jnp.sum(sr * sr, axis=-1)
    cos = dot / jnp.sqrt(jnp.maximum(w1 * w2, 1e-16))  # torch product-clamp semantics
    return total + lambda_repr * (1.0 - jnp.mean(cos))


if __name__ == "__main__":
    B, S, G = 2, 8, 32
    key = jax.random.PRNGKey(0)
    k1, k2, k3, k4, k5, k6 = jax.random.split(key, 6)

    teacher_outputs = {
        "attentions": {
            "att1": jax.random.normal(k1, (B, S, S), dtype=jnp.float32),
            "att2": jax.random.normal(k2, (B, S, S), dtype=jnp.float32),
        },
        "repr": jax.random.normal(k3, (B, G), dtype=jnp.float32),
    }
    student_outputs = {
        "attentions": {
            "att1": jax.random.normal(k4, (B, S, S), dtype=jnp.float32),
            "att2": jax.random.normal(k5, (B, S, S), dtype=jnp.float32),
        },
        "repr": jax.random.normal(k6, (B, G), dtype=jnp.float32),
    }

    alpha_attn, beta_attn, lambda_repr = 0.5, 0.5, 1.0
    attention_weights = {"att1": 0.6, "att2": 0.4}

    loss = knowledge_distillation_loss(
        teacher_outputs, student_outputs,
        alpha_attn=alpha_attn, beta_attn=beta_attn,
        lambda_repr=lambda_repr, attention_weights=attention_weights)
    loss = jax.block_until_ready(loss)

    ref = _reference_loss(teacher_outputs, student_outputs,
                          alpha_attn, beta_attn, lambda_repr,
                          attention_weights)
    assert jnp.allclose(loss, ref, rtol=1e-4, atol=1e-5), (loss, ref)

    print("KERNEL_OK")
</pallas_src>

<mosaic_0001>
module attributes {stable_mosaic.version = 11 : i64} {
  func.func @_attn_repr_kernel(%arg0: i32, %arg1: memref<16x8xf32, #tpu.memory_space<vmem>>, %arg2: memref<16x8xf32, #tpu.memory_space<vmem>>, %arg3: memref<2x32xf32, #tpu.memory_space<vmem>>, %arg4: memref<2x32xf32, #tpu.memory_space<vmem>>, %arg5: memref<1x8x128xf32, #tpu.memory_space<vmem>>) attributes {dimension_semantics = [#tpu.dimension_semantics<parallel>], iteration_bounds = array<i64: 1>, scalar_prefetch = 0 : i64, scratch_operands = 0 : i64, tpu.core_type = #tpu.core_type<tc>, window_params = [{transform_indices = @transform_0, window_bounds = array<i64: 16, 8>}, {transform_indices = @transform_1, window_bounds = array<i64: 16, 8>}, {pipeline_mode = #tpu.pipeline_mode<synchronous>, transform_indices = @transform_2, window_bounds = array<i64: 2, 32>}, {pipeline_mode = #tpu.pipeline_mode<synchronous>, transform_indices = @transform_3, window_bounds = array<i64: 2, 32>}, {transform_indices = @transform_4, window_bounds = array<i64: 1, 8, 128>}]} {
    %c0 = arith.constant 0 : index
    %c0_0 = arith.constant 0 : index
    %0 = vector.load %arg1[%c0, %c0_0] : memref<16x8xf32, #tpu.memory_space<vmem>>, vector<16x8xf32>
    %c0_1 = arith.constant 0 : index
    %c0_2 = arith.constant 0 : index
    %1 = vector.load %arg2[%c0_1, %c0_2] : memref<16x8xf32, #tpu.memory_space<vmem>>, vector<16x8xf32>
    %cst = arith.constant dense<0xFF800000> : vector<16xf32>
    %2 = vector.multi_reduction <maximumf>, %0, %cst [1] : vector<16x8xf32> to vector<16xf32>
    %3 = vector.shape_cast %2 : vector<16xf32> to vector<16x1xf32>
    %cst_3 = arith.constant dense<0xFF800000> : vector<16xf32>
    %4 = vector.multi_reduction <maximumf>, %1, %cst_3 [1] : vector<16x8xf32> to vector<16xf32>
    %5 = vector.shape_cast %4 : vector<16xf32> to vector<16x1xf32>
    %6 = vector.broadcast %3 : vector<16x1xf32> to vector<16x8xf32>
    %7 = arith.subf %0, %6 : vector<16x8xf32>
    %8 = math.exp %7 : vector<16x8xf32>
    %9 = vector.broadcast %5 : vector<16x1xf32> to vector<16x8xf32>
    %10 = arith.subf %1, %9 : vector<16x8xf32>
    %11 = math.exp %10 : vector<16x8xf32>
    %cst_4 = arith.constant dense<0.000000e+00> : vector<16xf32>
    %12 = vector.multi_reduction <add>, %8, %cst_4 [1] : vector<16x8xf32> to vector<16xf32>
    %13 = vector.shape_cast %12 : vector<16xf32> to vector<16x1xf32>
    %cst_5 = arith.constant dense<0.000000e+00> : vector<16xf32>
    %14 = vector.multi_reduction <add>, %11, %cst_5 [1] : vector<16x8xf32> to vector<16xf32>
    %15 = vector.shape_cast %14 : vector<16xf32> to vector<16x1xf32>
    %16 = vector.broadcast %13 : vector<16x1xf32> to vector<16x8xf32>
    %17 = arith.divf %8, %16 : vector<16x8xf32>
    %18 = vector.broadcast %15 : vector<16x1xf32> to vector<16x8xf32>
    %19 = arith.divf %11, %18 : vector<16x8xf32>
    %20 = arith.subf %0, %1 : vector<16x8xf32>
    %21 = arith.mulf %17, %20 : vector<16x8xf32>
    %cst_6 = arith.constant dense<0.000000e+00> : vector<16xf32>
    %22 = vector.multi_reduction <add>, %21, %cst_6 [1] : vector<16x8xf32> to vector<16xf32>
    %23 = vector.shape_cast %22 : vector<16xf32> to vector<16x1xf32>
    %24 = arith.subf %5, %3 : vector<16x1xf32>
    %25 = arith.addf %23, %24 : vector<16x1xf32>
    %26 = math.log %15 : vector<16x1xf32>
    %27 = arith.addf %25, %26 : vector<16x1xf32>
    %28 = math.log %13 : vector<16x1xf32>
    %29 = arith.subf %27, %28 : vector<16x1xf32>
    %30 = arith.subf %19, %17 : vector<16x8xf32>
    %31 = arith.mulf %30, %30 : vector<16x8xf32>
    %cst_7 = arith.constant dense<0.000000e+00> : vector<16xf32>
    %32 = vector.multi_reduction <add>, %31, %cst_7 [1] : vector<16x8xf32> to vector<16xf32>
    %33 = vector.shape_cast %32 : vector<16xf32> to vector<16x1xf32>
    %c16_i32 = arith.constant 16 : i32
    %34 = arith.muli %arg0, %c16_i32 : i32
    %35 = tpu.iota {dimensions = array<i32: 0>} : vector<16x1xi32>
    %36 = vector.broadcast %34 : i32 to vector<16x1xi32>
    %37 = arith.addi %36, %35 : vector<16x1xi32>
    %c16_i32_8 = arith.constant 16 : i32
    %38 = vector.broadcast %c16_i32_8 : i32 to vector<16x1xi32>
    %39 = arith.cmpi slt, %37, %38 : vector<16x1xi32>
    %cst_9 = arith.constant 0.000000e+00 : f32
    %40 = vector.broadcast %cst_9 : f32 to vector<16x1xf32>
    %41 = arith.select %39, %29, %40 : vector<16x1xi1>, vector<16x1xf32>
    %42 = vector.shape_cast %41 : vector<16x1xf32> to vector<1x16x1xf32>
    %cst_10 = arith.constant dense<0.000000e+00> : vector<1xf32>
    %43 = vector.multi_reduction <add>, %42, %cst_10 [1, 2] : vector<1x16x1xf32> to vector<1xf32>
    %44 = vector.shape_cast %43 : vector<1xf32> to vector<1x1x1xf32>
    %45 = vector.extract %44[0, 0, 0] : f32 from vector<1x1x1xf32>
    %cst_11 = arith.constant 0.000000e+00 : f32
    %46 = vector.broadcast %cst_11 : f32 to vector<16x1xf32>
    %47 = arith.select %39, %33, %46 : vector<16x1xi1>, vector<16x1xf32>
    %48 = vector.shape_cast %47 : vector<16x1xf32> to vector<1x16x1xf32>
    %cst_12 = arith.constant dense<0.000000e+00> : vector<1xf32>
    %49 = vector.multi_reduction <add>, %48, %cst_12 [1, 2] : vector<1x16x1xf32> to vector<1xf32>
    %50 = vector.shape_cast %49 : vector<1xf32> to vector<1x1x1xf32>
    %51 = vector.extract %50[0, 0, 0] : f32 from vector<1x1x1xf32>
    %c0_i32 = arith.constant 0 : i32
    %52 = arith.cmpi ne, %arg0, %c0_i32 : i32
    %53 = arith.extui %52 : i1 to i32
    %c0_i32_13 = arith.constant 0 : i32
    %54 = arith.cmpi ne, %53, %c0_i32_13 : i32
    scf.if %54 {
      %58 = tpu.iota {dimensions = array<i32: 0>} : vector<8x128xi32>
      %59 = tpu.iota {dimensions = array<i32: 1>} : vector<8x128xi32>
      %c0_i32_16 = arith.constant 0 : i32
      %60 = vector.broadcast %c0_i32_16 : i32 to vector<8x128xi32>
      %61 = arith.cmpi eq, %59, %60 : vector<8x128xi32>
      %c0_i32_17 = arith.constant 0 : i32
      %62 = vector.broadcast %c0_i32_17 : i32 to vector<8x128xi32>
      %63 = arith.cmpi eq, %58, %62 : vector<8x128xi32>
      %64 = arith.andi %63, %61 : vector<8x128xi1>
      %c1_i32 = arith.constant 1 : i32
      %65 = vector.broadcast %c1_i32 : i32 to vector<8x128xi32>
      %66 = arith.cmpi eq, %58, %65 : vector<8x128xi32>
      %67 = arith.andi %66, %61 : vector<8x128xi1>
      %c2_i32 = arith.constant 2 : i32
      %68 = vector.broadcast %c2_i32 : i32 to vector<8x128xi32>
      %69 = arith.cmpi eq, %58, %68 : vector<8x128xi32>
      %70 = arith.andi %69, %61 : vector<8x128xi1>
      %cst_18 = arith.constant 0.000000e+00 : f32
      %cst_19 = arith.constant 0.000000e+00 : f32
      %71 = vector.broadcast %cst_18 : f32 to vector<8x128xf32>
      %72 = vector.broadcast %cst_19 : f32 to vector<8x128xf32>
      %73 = arith.select %70, %71, %72 : vector<8x128xi1>, vector<8x128xf32>
      %74 = vector.broadcast %51 : f32 to vector<8x128xf32>
      %75 = arith.select %67, %74, %73 : vector<8x128xi1>, vector<8x128xf32>
      %76 = vector.broadcast %45 : f32 to vector<8x128xf32>
      %77 = arith.select %64, %76, %75 : vector<8x128xi1>, vector<8x128xf32>
      %c0_20 = arith.constant 0 : index
      %c0_21 = arith.constant 0 : index
      %c0_22 = arith.constant 0 : index
      %78 = vector.load %arg5[%c0_20, %c0_21, %c0_22] : memref<1x8x128xf32, #tpu.memory_space<vmem>>, vector<1x8x128xf32>
      %79 = vector.shape_cast %78 : vector<1x8x128xf32> to vector<8x128xf32>
      %80 = vector.shape_cast %77 : vector<8x128xf32> to vector<1x8x128xf32>
      tpu.vector_store %arg5[%c0_20, %c0_21, %c0_22], %80 {strides = array<i32>} : memref<1x8x128xf32, #tpu.memory_space<vmem>>, vector<1x8x128xf32>,
    } else {
    }
    %c0_i32_14 = arith.constant 0 : i32
    %55 = arith.cmpi eq, %arg0, %c0_i32_14 : i32
    %56 = arith.extui %55 : i1 to i32
    %c0_i32_15 = arith.constant 0 : i32
    %57 = arith.cmpi ne, %56, %c0_i32_15 : i32
    scf.if %57 {
      %c0_16 = arith.constant 0 : index
      %c0_17 = arith.constant 0 : index
      %58 = vector.load %arg3[%c0_16, %c0_17] : memref<2x32xf32, #tpu.memory_space<vmem>>, vector<2x32xf32>
      %c0_18 = arith.constant 0 : index
      %c0_19 = arith.constant 0 : index
      %59 = vector.load %arg4[%c0_18, %c0_19] : memref<2x32xf32, #tpu.memory_space<vmem>>, vector<2x32xf32>
      %60 = arith.mulf %58, %59 : vector<2x32xf32>
      %cst_20 = arith.constant dense<0.000000e+00> : vector<2xf32>
      %61 = vector.multi_reduction <add>, %60, %cst_20 [1] : vector<2x32xf32> to vector<2xf32>
      %62 = vector.shape_cast %61 : vector<2xf32> to vector<2x1xf32>
      %63 = arith.mulf %58, %58 : vector<2x32xf32>
      %cst_21 = arith.constant dense<0.000000e+00> : vector<2xf32>
      %64 = vector.multi_reduction <add>, %63, %cst_21 [1] : vector<2x32xf32> to vector<2xf32>
      %65 = vector.shape_cast %64 : vector<2xf32> to vector<2x1xf32>
      %66 = arith.mulf %59, %59 : vector<2x32xf32>
      %cst_22 = arith.constant dense<0.000000e+00> : vector<2xf32>
      %67 = vector.multi_reduction <add>, %66, %cst_22 [1] : vector<2x32xf32> to vector<2xf32>
      %68 = vector.shape_cast %67 : vector<2xf32> to vector<2x1xf32>
      %69 = arith.mulf %65, %68 : vector<2x1xf32>
      %cst_23 = arith.constant 1.000000e-16 : f32
      %70 = vector.broadcast %cst_23 : f32 to vector<2x1xf32>
      %71 = arith.maximumf %69, %70 : vector<2x1xf32>
      %72 = math.rsqrt %71 : vector<2x1xf32>
      %73 = arith.mulf %62, %72 : vector<2x1xf32>
      %74 = vector.shape_cast %73 : vector<2x1xf32> to vector<1x2x1xf32>
      %cst_24 = arith.constant dense<0.000000e+00> : vector<1xf32>
      %75 = vector.multi_reduction <add>, %74, %cst_24 [1, 2] : vector<1x2x1xf32> to vector<1xf32>
      %76 = vector.shape_cast %75 : vector<1xf32> to vector<1x1x1xf32>
      %77 = vector.extract %76[0, 0, 0] : f32 from vector<1x1x1xf32>
      %78 = tpu.iota {dimensions = array<i32: 0>} : vector<8x128xi32>
      %79 = tpu.iota {dimensions = array<i32: 1>} : vector<8x128xi32>
      %c0_i32_25 = arith.constant 0 : i32
      %80 = vector.broadcast %c0_i32_25 : i32 to vector<8x128xi32>
      %81 = arith.cmpi eq, %79, %80 : vector<8x128xi32>
      %c0_i32_26 = arith.constant 0 : i32
      %82 = vector.broadcast %c0_i32_26 : i32 to vector<8x128xi32>
      %83 = arith.cmpi eq, %78, %82 : vector<8x128xi32>
      %84 = arith.andi %83, %81 : vector<8x128xi1>
      %c1_i32 = arith.constant 1 : i32
      %85 = vector.broadcast %c1_i32 : i32 to vector<8x128xi32>
      %86 = arith.cmpi eq, %78, %85 : vector<8x128xi32>
      %87 = arith.andi %86, %81 : vector<8x128xi1>
      %c2_i32 = arith.constant 2 : i32
      %88 = vector.broadcast %c2_i32 : i32 to vector<8x128xi32>
      %89 = arith.cmpi eq, %78, %88 : vector<8x128xi32>
      %90 = arith.andi %89, %81 : vector<8x128xi1>
      %cst_27 = arith.constant 0.000000e+00 : f32
      %91 = vector.broadcast %77 : f32 to vector<8x128xf32>
      %92 = vector.broadcast %cst_27 : f32 to vector<8x128xf32>
      %93 = arith.select %90, %91, %92 : vector<8x128xi1>, vector<8x128xf32>
      %94 = vector.broadcast %51 : f32 to vector<8x128xf32>
      %95 = arith.select %87, %94, %93 : vector<8x128xi1>, vector<8x128xf32>
      %96 = vector.broadcast %45 : f32 to vector<8x128xf32>
      %97 = arith.select %84, %96, %95 : vector<8x128xi1>, vector<8x128xf32>
      %c0_28 = arith.constant 0 : index
      %c0_29 = arith.constant 0 : index
      %c0_30 = arith.constant 0 : index
      %98 = vector.load %arg5[%c0_28, %c0_29, %c0_30] : memref<1x8x128xf32, #tpu.memory_space<vmem>>, vector<1x8x128xf32>
      %99 = vector.shape_cast %98 : vector<1x8x128xf32> to vector<8x128xf32>
      %100 = vector.shape_cast %97 : vector<8x128xf32> to vector<1x8x128xf32>
      tpu.vector_store %arg5[%c0_28, %c0_29, %c0_30], %100 {strides = array<i32>} : memref<1x8x128xf32, #tpu.memory_space<vmem>>, vector<1x8x128xf32>,
    } else {
    }
    return
  }
  func.func @transform_0(%arg0: i32) -> (i32, i32) {
    %c0_i32 = arith.constant 0 : i32
    %c0_i32_0 = arith.constant 0 : i32
    return %arg0, %c0_i32 : i32, i32
  }
  func.func @transform_1(%arg0: i32) -> (i32, i32) {
    %c0_i32 = arith.constant 0 : i32
    %c0_i32_0 = arith.constant 0 : i32
    return %arg0, %c0_i32 : i32, i32
  }
  func.func @transform_2(%arg0: i32) -> (i32, i32) {
    %c0_i32 = arith.constant 0 : i32
    %c0_i32_0 = arith.constant 0 : i32
    %c0_i32_1 = arith.constant 0 : i32
    return %c0_i32, %c0_i32_0 : i32, i32
  }
  func.func @transform_3(%arg0: i32) -> (i32, i32) {
    %c0_i32 = arith.constant 0 : i32
    %c0_i32_0 = arith.constant 0 : i32
    %c0_i32_1 = arith.constant 0 : i32
    return %c0_i32, %c0_i32_0 : i32, i32
  }
  func.func @transform_4(%arg0: i32) -> (i32, i32, i32) {
    %c0_i32 = arith.constant 0 : i32
    %c0_i32_0 = arith.constant 0 : i32
    %c0_i32_1 = arith.constant 0 : i32
    return %arg0, %c0_i32, %c0_i32_0 : i32, i32, i32
  }
}

</mosaic_0001>

<llo_original>
// kernel: tpu_custom_call.1
$region0: #{tpu_custom_call.1}
  #allocation0 [shape = 'u32[]', space=smem, size = 0x4, offset = 0x4, fixed_abs, tag = 'smem constant byte address 0x4 - core index']
  #allocation1 [shape = 'u32[144,128]{1,0:T(1,128)}', space=vmem, size = 0x12000, scoped, tag = 'internal scratch']
  %s0 = inlined_call_operand.vmem [shape: f32[16,8], index: 0, kind: input, shape index: {}]
  %s1 = inlined_call_operand.vmem [shape: f32[16,8], index: 1, kind: input, shape index: {}]
  %s2 = inlined_call_operand.vmem [shape: f32[2,32], index: 2, kind: input, shape index: {}]
  %s3 = inlined_call_operand.vmem [shape: f32[2,32], index: 3, kind: input, shape index: {}]
  %s4 = inlined_call_operand.hbm [shape: f32[1,8,128], index: 4, kind: output, shape index: {}]
  %s5 = sld [smem:[#allocation0]]
  $region34: #{tpu_custom_call.1} parent=0
    _
  %s7 = ssub.s32 1, %s5
  %s8 = scalar_select 0, %s7, %s5
  $region1: #{tpu_custom_call.1} parent=0
    #allocation2 [shape = 'u8[4096]{0}', space=vmem, size = 0x1000, scoped, tag = 'output window, operand 0, single buffered']
    #allocation3 [shape = 's32[1]{0}', space=sflag, size = 0x4, scoped, tag = 'scoped memory for tpu_custom_call.1']
    %9 = vsyncpa [#allocation3], 0
    // Predicated region
    $region2: #{tpu_custom_call.1} parent=1 // pred_check
      _
    $region3: #{tpu_custom_call.1} parent=1 // pred_check_branch
      %11 = sbr.rel (0) target = $region5
    $region4: #{tpu_custom_call.1} parent=1 // pred_region
      _
    $region5: #{tpu_custom_call.1} parent=1 // pred_fallthru
      _
    // Predicated region
    $region6: #{tpu_custom_call.1} parent=1 // pred_check
      _
    $region7: #{tpu_custom_call.1} parent=1 // pred_check_branch
      %13 = sbr.rel (0) target = $region9
    $region8: #{tpu_custom_call.1} parent=1 // pred_region
      _
    $region9: #{tpu_custom_call.1} parent=1 // pred_fallthru
      _
    // Predicated region
    $region10: #{tpu_custom_call.1} parent=1 // pred_check
      _
    $region11: #{tpu_custom_call.1} parent=1 // pred_check_branch
      %15 = sbr.rel (0) target = $region13
    $region12: #{tpu_custom_call.1} parent=1 // pred_region
      _
    $region13: #{tpu_custom_call.1} parent=1 // pred_fallthru
      _
    // Predicated region
    $region14: #{tpu_custom_call.1} parent=1 // pred_check
      _
    $region15: #{tpu_custom_call.1} parent=1 // pred_check_branch
      %17 = sbr.rel (0) target = $region17
    $region16: #{tpu_custom_call.1} parent=1 // pred_region
      _
    $region17: #{tpu_custom_call.1} parent=1 // pred_fallthru
      _
    %v18 = vld [vmem:[%s0] sm:$0xff]
    %v19 = vld [vmem:[%s0 + $0x8] sm:$0xff]
    %v20 = vld [vmem:[%s1] sm:$0xff]
    %v21 = vld [vmem:[%s1 + $0x8] sm:$0xff]
    %vm22 = vcmask 64512
    %v23 = vsel %vm22, %v18, -inf
    %24 = vmax.xlane.f32.xlu0 %v23
    %v25 = vpop.xlane.xlu0 %24
    %v26 = vsel %vm22, %v19, -inf
    %27 = vmax.xlane.f32.xlu0 %v26
    %v28 = vpop.xlane.xlu0 %27
    %v29 = vsel %vm22, %v20, -inf
    %30 = vmax.xlane.f32.xlu0 %v29
    %v31 = vpop.xlane.xlu0 %30
    %v32 = vsel %vm22, %v21, -inf
    %33 = vmax.xlane.f32.xlu0 %v32
    %v34 = vpop.xlane.xlu0 %33
    %v35 = vsub.f32 %v18, %v25
    %v36 = vsub.f32 %v19, %v28
    %v37 = vmul.f32 %v35, 1.442695
    %v38 = vpow.pop %v37
    %v39 = vmul.f32 %v36, 1.442695
    %v40 = vpow.pop %v39
    %v41 = vsub.f32 %v20, %v31
    %v42 = vsub.f32 %v21, %v34
    %v43 = vmul.f32 %v41, 1.442695
    %v44 = vpow.pop %v43
    %v45 = vmul.f32 %v42, 1.442695
    %v46 = vpow.pop %v45
    %v47 = vsel %vm22, %v38, 0.0
    %48 = vadd.xlane.f32.xlu0 %v47
    %v49 = vpop.xlane.xlu0 %48
    %v50 = vsel %vm22, %v40, 0.0
    %51 = vadd.xlane.f32.xlu0 %v50
    %v52 = vpop.xlane.xlu0 %51
    %v53 = vsel %vm22, %v44, 0.0
    %54 = vadd.xlane.f32.xlu0 %v53
    %v55 = vpop.xlane.xlu0 %54
    %v56 = vsel %vm22, %v46, 0.0
    %57 = vadd.xlane.f32.xlu0 %v56
    %v58 = vpop.xlane.xlu0 %57
    %v59 = vrcp.pop %v49
    %v60 = vmul.f32 %v38, %v59
    %v61 = vrcp.pop %v52
    %v62 = vmul.f32 %v40, %v61
    %v63 = vrcp.pop %v55
    %v64 = vmul.f32 %v44, %v63
    %v65 = vrcp.pop %v58
    %v66 = vmul.f32 %v46, %v65
    %v67 = vsub.f32 %v18, %v20
    %v68 = vsub.f32 %v19, %v21
    %v69 = vmul.f32 %v60, %v67
    %v70 = vmul.f32 %v62, %v68
    %v71 = vsel %vm22, %v69, 0.0
    %72 = vadd.xlane.f32.xlu0 %v71
    %v73 = vpop.xlane.xlu0 %72
    %v74 = vsel %vm22, %v70, 0.0
    %75 = vadd.xlane.f32.xlu0 %v74
    %v76 = vpop.xlane.xlu0 %75
    %v77 = vsub.f32 %v31, %v25
    %v78 = vsub.f32 %v34, %v28
    %v79 = vadd.f32 %v73, %v77
    %v80 = vadd.f32 %v76, %v78
    %v81 = vlog2.pop %v55
    %v82 = vmul.f32 %v81, 0.6931472
    %v83 = vlog2.pop %v58
    %v84 = vmul.f32 %v83, 0.6931472
    %v85 = vadd.f32 %v79, %v82
    %v86 = vadd.f32 %v80, %v84
    %v87 = vlog2.pop %v49
    %v88 = vmul.f32 %v87, 0.6931472
    %v89 = vlog2.pop %v52
    %v90 = vmul.f32 %v89, 0.6931472
    %v91 = vsub.f32 %v85, %v88
    %v92 = vsub.f32 %v86, %v90
    %v93 = vsub.f32 %v64, %v60
    %v94 = vsub.f32 %v66, %v62
    %v95 = vmul.f32 %v93, %v93
    %v96 = vmul.f32 %v94, %v94
    %v97 = vsel %vm22, %v95, 0.0
    %98 = vadd.xlane.f32.xlu0 %v97
    %v99 = vpop.xlane.xlu0 %98
    %v100 = vsel %vm22, %v96, 0.0
    %101 = vadd.xlane.f32.xlu0 %v100
    %v102 = vpop.xlane.xlu0 %101
    %s103 = smul.u32 0, 16
    %v104 = vlaneseq
    %v105 = vshrl.u32 %v104, 7
    %v106 = vadd.s32 %v105, 8
    %v107 = vstv %s103
    %v108 = vadd.s32 %v107, %v105
    %v109 = vadd.s32 %v107, %v106
    %vm110 = vcmp.lt.s32.totalorder %v108, 16
    %vm111 = vcmp.lt.s32.totalorder %v109, 16
    %v112 = vsel %vm110, %v91, 0.0
    %v113 = vsel %vm111, %v92, 0.0
    %vm114 = vcmask 7168
    %v115 = vsel %vm114, %v112, 0.0
    %v116 = vsel %vm114, %v113, 0.0
    %v117 = vadd.f32 %v115, %v116
    %118 = vadd.xlane.f32.xlu0 %v117
    %v119 = vpop.xlane.xlu0 %118
    %v120 = vrot.slane %v119, 4
    %v121 = vadd.f32 %v119, %v120
    %v122 = vrot.slane %v121, 2
    %v123 = vadd.f32 %v121, %v122
    %v124 = vrot.slane %v123, 1
    %v125 = vadd.f32 %v123, %v124
    %s126 = vtos %v125
    %v127 = vsel %vm110, %v99, 0.0
    %v128 = vsel %vm111, %v102, 0.0
    %v129 = vsel %vm114, %v127, 0.0
    %v130 = vsel %vm114, %v128, 0.0
    %v131 = vadd.f32 %v129, %v130
    %132 = vadd.xlane.f32.xlu0 %v131
    %v133 = vpop.xlane.xlu0 %132
    %v134 = vrot.slane %v133, 4
    %v135 = vadd.f32 %v133, %v134
    %v136 = vrot.slane %v135, 2
    %v137 = vadd.f32 %v135, %v136
    %v138 = vrot.slane %v137, 1
    %v139 = vadd.f32 %v137, %v138
    %s140 = vtos %v139
    %p141 = scmp.ne.s32.totalorder 0, 0
    // Predicated region
    $region18: #{tpu_custom_call.1} parent=1 // pred_check
      %p142 = pneg %p141
    $region19: #{tpu_custom_call.1} parent=1 // pred_check_branch
      %144 = sbr.rel (%p142) target = $region21
    $region20: #{tpu_custom_call.1} parent=1 // pred_region
      %v145 = vlaneseq
      %v146 = vand.u32 %v145, 127
      %vm147 = vcmp.eq.s32.totalorder %v146, 0
      %vm148 = vcmp.eq.s32.totalorder %v105, 0
      %vm149 = vmand %vm148, %vm147
      %vm150 = vcmp.eq.s32.totalorder %v105, 1
      %vm151 = vmand %vm150, %vm147
      %v152 = vstv %s140
      %v153 = vsel %vm151, %v152, 0.0
      %v154 = vstv %s126
      %v155 = vsel %vm149, %v154, %v153
      %156 = vst [vmem:[#allocation2] sm:$0xff] %v155
    $region21: #{tpu_custom_call.1} parent=1 // pred_fallthru
      _
    %p157 = scmp.eq.s32.totalorder 0, 0
    // Predicated region
    $region22: #{tpu_custom_call.1} parent=1 // pred_check
      %p158 = pneg %p157
    $region23: #{tpu_custom_call.1} parent=1 // pred_check_branch
      %160 = sbr.rel (%p158) target = $region25
    $region24: #{tpu_custom_call.1} parent=1 // pred_region
      %v161 = vld [vmem:[%s2] sm:$0x3]
      %v162 = vld [vmem:[%s3] sm:$0x3]
      %v163 = vmul.f32 %v161, %v162
      %vm164 = vcmask 254976
      %v165 = vsel %vm164, %v163, 0.0
      %166 = vadd.xlane.f32.xlu0 %v165
      %v167 = vpop.xlane.xlu0 %166
      %v168 = vmul.f32 %v161, %v161
      %v169 = vsel %vm164, %v168, 0.0
      %170 = vadd.xlane.f32.xlu0 %v169
      %v171 = vpop.xlane.xlu0 %170
      %v172 = vmul.f32 %v162, %v162
      %v173 = vsel %vm164, %v172, 0.0
      %174 = vadd.xlane.f32.xlu0 %v173
      %v175 = vpop.xlane.xlu0 %174
      %v176 = vmul.f32 %v171, %v175
      %v177 = vmax.f32 %v176, 1e-16
      %v178 = vrsqrt.pop %v177
      %v179 = vmul.f32 %v167, %v178
      %vm180 = vcmask 1024
      %v181 = vsel %vm180, %v179, 0.0
      %182 = vadd.xlane.f32.xlu0 %v181
      %v183 = vpop.xlane.xlu0 %182
      %v184 = vrot.slane %v183, 4
      %v185 = vadd.f32 %v183, %v184
      %v186 = vrot.slane %v185, 2
      %v187 = vadd.f32 %v185, %v186
      %v188 = vrot.slane %v187, 1
      %v189 = vadd.f32 %v187, %v188
      %s190 = vtos %v189
      %v191 = vlaneseq
      %v192 = vand.u32 %v191, 127
      %vm193 = vcmp.eq.s32.totalorder %v192, 0
      %vm194 = vcmp.eq.s32.totalorder %v105, 0
      %vm195 = vmand %vm194, %vm193
      %vm196 = vcmp.eq.s32.totalorder %v105, 1
      %vm197 = vmand %vm196, %vm193
      %vm198 = vcmp.eq.s32.totalorder %v105, 2
      %vm199 = vmand %vm198, %vm193
      %v200 = vstv %s190
      %v201 = vsel %vm199, %v200, 0.0
      %v202 = vstv %s140
      %v203 = vsel %vm197, %v202, %v201
      %v204 = vstv %s126
      %v205 = vsel %vm195, %v204, %v203
      %206 = vst [vmem:[#allocation2] sm:$0xff] %v205
    $region25: #{tpu_custom_call.1} parent=1 // pred_fallthru
      _
    // Predicated region
    $region26: #{tpu_custom_call.1} parent=1 // pred_check
      _
    $region27: #{tpu_custom_call.1} parent=1 // pred_check_branch
      %208 = sbr.rel (0) target = $region29
    $region28: #{tpu_custom_call.1} parent=1 // pred_region
      %s210 = ssub.s32 128, 128
      %211 = vsyncadd [#allocation3], %s210
      %s213 = sshll.u32 [#allocation2], 4
      %s214 = int_to_ptr.vmem [resolvable:$true] %s213
      %216 = dma.vmem_to_hbm [thread:$0]  %s214, 128, %s4, [#allocation3]
    $region29: #{tpu_custom_call.1} parent=1 // pred_fallthru
      _
    // Predicated region
    $region30: #{tpu_custom_call.1} parent=1 // pred_check
      _
    $region31: #{tpu_custom_call.1} parent=1 // pred_check_branch
      %218 = sbr.rel (0) target = $region33
    $region32: #{tpu_custom_call.1} parent=1 // pred_region
      %219 = dma.done [#allocation3], 128
    $region33: #{tpu_custom_call.1} parent=1 // pred_fallthru
      _
    %220 = vsyncpa [#allocation3], 1

</llo_original>
